<compile_context>
chip_gen: v6e
topology: v6e:2x2x1
jax: 0.10.0
libtpu: 0.0.40
codegen_flags: <defaults>
</compile_context>

<pallas_src>
import math

import jax
import jax.numpy as jnp
from jax.experimental import pallas as pl
from jax.experimental.pallas import tpu as pltpu

_CIN_MAX = 10  # max conv input channels across stages (2, 10, 10)


# --------------------------------------------------------------------------------
# Fused kernel: whole CnnNet forward for one batch block (B_blk elements).
# --------------------------------------------------------------------------------
def _cnn_fused_kernel(x_ref, w_ref, b_ref, o_ref):
    """x_ref: (Cin, R)        R = B_blk*L; column b*L+p is element b, position p.
    w_ref: (12, 10, 10)       row = 4*stage + 2*tap + parity; (cout/2, cin) blocks,
                              out channels split even/odd so the channel-pair pool is
                              an elementwise max of the two halves; cin zero-padded.
    b_ref: (6, 10, 1)         row = 2*stage + parity.
    o_ref: (10, R)            dense stride-space stage-3 activations; the true pooled
                              outputs of element b sit at columns b*L + 8*l."""
    a = x_ref[...]                                     # (Cin, R)

    def stage(a, s, idx):
        # conv1d(kernel=2) + 2x2 max-pool (channel pairs & position pairs) + ReLU,
        # computed densely in "stride space": the true activations of this stage sit at
        # columns that are multiples of `s`; the next stage doubles the stride, so no
        # subsampling / gathers are ever needed in-kernel.  Columns contaminated across
        # batch-element boundaries never feed a true output (receptive-field argument).
        k = a.shape[0]                                 # input channels of this stage
        n = a.shape[1] - s                             # dense conv width
        m = n - s                                      # dense pooled width
        a0, a1 = a[:, :n], a[:, s:]                    # the two conv taps

        def half(parity):                              # even / odd output channels
            w0 = w_ref[4 * idx + parity][:, :k]        # tap-0 weights (10, k)
            w1 = w_ref[4 * idx + 2 + parity][:, :k]    # tap-1 weights (10, k)
            return (jnp.dot(w0, a0, preferred_element_type=jnp.float32)
                    + jnp.dot(w1, a1, preferred_element_type=jnp.float32)
                    + b_ref[2 * idx + parity])         # (10, 1) bias broadcasts on lanes

        yc = jnp.maximum(half(0), half(1))             # max over out-channel pairs (10, n)
        q = jnp.maximum(yc[:, :m], yc[:, s:])          # max over position pairs    (10, m)
        return jnp.maximum(q, 0.0)                     # ReLU

    r1 = stage(a, 1, 0)                                # true P1[b,:,l] at column b*L + 2*l
    r2 = stage(r1, 2, 1)                               # true P2[b,:,l] at column b*L + 4*l
    r3 = stage(r2, 4, 2)                               # true P3[b,:,l] at column b*L + 8*l
    # Single lane-dense store (unwritten tail columns are never read by the wrapper).
    o_ref[:, :r3.shape[1]] = r3.astype(o_ref.dtype)


# --------------------------------------------------------------------------------
# One-time parameter packing (hoisted out of the forward path): 2 slabs instead of 9.
# --------------------------------------------------------------------------------
def pack_params(params):
    w_rows, b_rows = [], []
    for s in (1, 2, 3):
        w, b = params[f"w{s}"], params[f"b{s}"]        # (Cout, Cin, 2), (Cout,)
        cout, cin, _ = w.shape
        assert cout % 2 == 0, "even/odd channel-pair pooling needs an even Cout"
        assert cin <= _CIN_MAX
        for tap in range(2):
            for parity in range(2):
                blk = w[parity::2, :, tap]             # (Cout//2, Cin)
                w_rows.append(jnp.pad(blk, ((0, 0), (0, _CIN_MAX - cin))))
        for parity in range(2):
            b_rows.append(b[parity::2, None])          # (Cout//2, 1)
    return jnp.stack(w_rows), jnp.stack(b_rows)        # (12,10,10), (6,10,1)


# --------------------------------------------------------------------------------
# Forward wrapper (single pallas_call, batch-blocked grid).
# --------------------------------------------------------------------------------
def cnn_forward(x, w_slab, b_slab, *, block_batch=256):
    """x: (N, Cin, L) float32 -> (N, 10 * m3), identical to CnnNet.forward."""
    n, cin, l = x.shape
    m1 = (l - 1) // 2
    m2 = (m1 - 1) // 2
    m3 = (m2 - 1) // 2
    h = b_slab.shape[1]                                # pooled channels (10)
    assert m3 >= 1, "input length too short for three conv+pool stages"
    assert cin <= w_slab.shape[2]

    # channels -> sublanes, (batch, length) -> lanes (one cheap wrapper-side transpose)
    xt = jnp.transpose(x, (1, 0, 2)).reshape(cin, n * l)

    # Per-step batch block: big enough to amortize fixed per-step cost and keep every dot
    # and the store >=128 lanes wide, small enough to leave >=2 grid steps when the batch
    # allows it (both v7x TensorCores busy).  b_blk*l must be a multiple of 128 for
    # lane-aligned blocks; the batch is zero-padded to a multiple of b_blk and the padding
    # sliced off the output.  VMEM stays a few MiB even at block_batch=256 (L=32), far
    # under every generation's scoped budget, so no vmem_limit_bytes is needed.
    block_batch = max(1, min(block_batch, 16384 // l))
    align = 128 // math.gcd(l, 128)
    b_blk = max(align, min(block_batch, -(-n // (2 * align)) * align))
    n_pad = -(-n // b_blk) * b_blk
    steps = n_pad // b_blk
    if n_pad != n:
        xt = jnp.pad(xt, ((0, 0), (0, (n_pad - n) * l)))
    r_blk = b_blk * l

    out = pl.pallas_call(
        _cnn_fused_kernel,
        out_shape=jax.ShapeDtypeStruct((h, n_pad * l), jnp.float32),
        grid=(steps,),
        in_specs=[
            pl.BlockSpec((cin, r_blk), lambda i: (0, i)),
            pl.BlockSpec(w_slab.shape, lambda i: (0, 0, 0)),
            pl.BlockSpec(b_slab.shape, lambda i: (0, 0, 0)),
        ],
        out_specs=pl.BlockSpec((h, r_blk), lambda i: (0, i)),
        compiler_params=pltpu.CompilerParams(
            dimension_semantics=("parallel",)),        # shards batch blocks across v7x TCs
    )(xt, w_slab, b_slab)

    # True stage-3 outputs of element b sit at columns b*l + 8*j (j < m3).  Subsample and
    # flatten channel-major (PyTorch x.view(N, -1) of an (N, 10, m3) tensor) on tiny data.
    out = out.reshape(h, n_pad, l)[:, :n, : 8 * m3 : 8]   # (h, N, m3)
    return jnp.transpose(out, (1, 0, 2)).reshape(n, h * m3)


# ---------------- pure-JAX reference (for correctness check only) ----------------
def _ref_stage(x, w, b):
    conv = jax.lax.conv_general_dilated(
        x, w, window_strides=(1,), padding="VALID",
        dimension_numbers=("NCH", "OIH", "NCH")) + b[None, :, None]
    pooled = jax.lax.reduce_window(conv, -jnp.inf, jax.lax.max,
                                   (1, 2, 2), (1, 2, 2), "VALID")
    return jnp.maximum(pooled, 0.0)


def ref_forward(x, params):
    x = _ref_stage(x, params["w1"], params["b1"])
    x = _ref_stage(x, params["w2"], params["b2"])
    x = _ref_stage(x, params["w3"], params["b3"])
    return x.reshape(x.shape[0], -1)


# ---------------- deterministic parameter init (PyTorch-style uniform) ----------
def _conv_params(key, cout, cin, ksize):
    kw, kb = jax.random.split(key)
    bound = 1.0 / (cin * ksize) ** 0.5
    w = jax.random.uniform(kw, (cout, cin, ksize), jnp.float32, -bound, bound)
    b = jax.random.uniform(kb, (cout,), jnp.float32, -bound, bound)
    return w, b


def init_params(key):
    k1, k2, k3 = jax.random.split(key, 3)
    w1, b1 = _conv_params(k1, 20, 2, 2)     # nn.Conv1d(2, 20, 2)
    w2, b2 = _conv_params(k2, 20, 10, 2)    # nn.Conv1d(10, 20, 2)
    w3, b3 = _conv_params(k3, 20, 10, 2)    # nn.Conv1d(10, 20, 2)
    return {"w1": w1, "b1": b1, "w2": w2, "b2": b2, "w3": w3, "b3": b3}


if __name__ == "__main__":
    key = jax.random.PRNGKey(0)
    kp, kx1, kx2 = jax.random.split(key, 3)
    params = init_params(kp)
    w_slab, b_slab = pack_params(params)    # packed once, reused every forward

    fwd = jax.jit(cnn_forward)

    # small input consistent with the module: (batch=2, channels=2, length=32)
    x = jax.random.normal(kx1, (2, 2, 32), jnp.float32)
    out = jax.block_until_ready(fwd(x, w_slab, b_slab))
    ref = ref_forward(x, params)
    assert out.shape == (2, 30), out.shape
    assert jnp.allclose(out, ref, atol=1e-4, rtol=1e-4), float(jnp.max(jnp.abs(out - ref)))

    # re-verify the batch-blocked multi-step path (grid=(2,), padded batch) per review.
    x2 = jax.random.normal(kx2, (10, 2, 32), jnp.float32)
    out2 = jax.block_until_ready(fwd(x2, w_slab, b_slab))
    ref2 = ref_forward(x2, params)
    assert out2.shape == (10, 30), out2.shape
    assert jnp.allclose(out2, ref2, atol=1e-4, rtol=1e-4), float(jnp.max(jnp.abs(out2 - ref2)))

    print("KERNEL_OK")
</pallas_src>

<mosaic_0001>
module attributes {stable_mosaic.version = 11 : i64} {
  func.func @_cnn_fused_kernel(%arg0: i32, %arg1: memref<2x128xf32, #tpu.memory_space<vmem>>, %arg2: memref<12x10x10xf32, #tpu.memory_space<vmem>>, %arg3: memref<6x10x1xf32, #tpu.memory_space<vmem>>, %arg4: memref<10x128xf32, #tpu.memory_space<vmem>>) attributes {dimension_semantics = [#tpu.dimension_semantics<parallel>], iteration_bounds = array<i64: 1>, scalar_prefetch = 0 : i64, scratch_operands = 0 : i64, tpu.core_type = #tpu.core_type<tc>, window_params = [{transform_indices = @transform_0, window_bounds = array<i64: 2, 128>}, {pipeline_mode = #tpu.pipeline_mode<synchronous>, transform_indices = @transform_1, window_bounds = array<i64: 12, 10, 10>}, {pipeline_mode = #tpu.pipeline_mode<synchronous>, transform_indices = @transform_2, window_bounds = array<i64: 6, 10, 1>}, {transform_indices = @transform_3, window_bounds = array<i64: 10, 128>}]} {
    %c0 = arith.constant 0 : index
    %c0_0 = arith.constant 0 : index
    %0 = vector.load %arg1[%c0, %c0_0] : memref<2x128xf32, #tpu.memory_space<vmem>>, vector<2x128xf32>
    %1 = vector.extract_strided_slice %0 {offsets = [0, 0], sizes = [2, 127], strides = [1, 1]} : vector<2x128xf32> to vector<2x127xf32>
    %2 = vector.extract_strided_slice %0 {offsets = [0, 1], sizes = [2, 127], strides = [1, 1]} : vector<2x128xf32> to vector<2x127xf32>
    %c0_1 = arith.constant 0 : index
    %c0_2 = arith.constant 0 : index
    %c0_3 = arith.constant 0 : index
    %3 = vector.load %arg2[%c0_1, %c0_2, %c0_3] : memref<12x10x10xf32, #tpu.memory_space<vmem>>, vector<1x10x10xf32>
    %4 = vector.shape_cast %3 : vector<1x10x10xf32> to vector<10x10xf32>
    %5 = vector.extract_strided_slice %4 {offsets = [0, 0], sizes = [10, 2], strides = [1, 1]} : vector<10x10xf32> to vector<10x2xf32>
    %c2 = arith.constant 2 : index
    %c0_4 = arith.constant 0 : index
    %c0_5 = arith.constant 0 : index
    %6 = vector.load %arg2[%c2, %c0_4, %c0_5] : memref<12x10x10xf32, #tpu.memory_space<vmem>>, vector<1x10x10xf32>
    %7 = vector.shape_cast %6 : vector<1x10x10xf32> to vector<10x10xf32>
    %8 = vector.extract_strided_slice %7 {offsets = [0, 0], sizes = [10, 2], strides = [1, 1]} : vector<10x10xf32> to vector<10x2xf32>
    %cst = arith.constant dense<0.000000e+00> : vector<10x127xf32>
    %9 = tpu.matmul %5, %1, %cst {dimension_numbers = #tpu.dot_dimension_numbers<[1], [0], [0], [1], [0, 0, 1, 1], [], []>} : vector<10x2xf32>, vector<2x127xf32>, vector<10x127xf32> -> vector<10x127xf32>
    %cst_6 = arith.constant dense<0.000000e+00> : vector<10x127xf32>
    %10 = tpu.matmul %8, %2, %cst_6 {dimension_numbers = #tpu.dot_dimension_numbers<[1], [0], [0], [1], [0, 0, 1, 1], [], []>} : vector<10x2xf32>, vector<2x127xf32>, vector<10x127xf32> -> vector<10x127xf32>
    %11 = arith.addf %9, %10 : vector<10x127xf32>
    %c0_7 = arith.constant 0 : index
    %c0_8 = arith.constant 0 : index
    %c0_9 = arith.constant 0 : index
    %12 = vector.load %arg3[%c0_7, %c0_8, %c0_9] : memref<6x10x1xf32, #tpu.memory_space<vmem>>, vector<1x10x1xf32>
    %13 = vector.shape_cast %12 : vector<1x10x1xf32> to vector<10x1xf32>
    %14 = vector.broadcast %13 : vector<10x1xf32> to vector<10x127xf32>
    %15 = arith.addf %11, %14 : vector<10x127xf32>
    %c1 = arith.constant 1 : index
    %c0_10 = arith.constant 0 : index
    %c0_11 = arith.constant 0 : index
    %16 = vector.load %arg2[%c1, %c0_10, %c0_11] : memref<12x10x10xf32, #tpu.memory_space<vmem>>, vector<1x10x10xf32>
    %17 = vector.shape_cast %16 : vector<1x10x10xf32> to vector<10x10xf32>
    %18 = vector.extract_strided_slice %17 {offsets = [0, 0], sizes = [10, 2], strides = [1, 1]} : vector<10x10xf32> to vector<10x2xf32>
    %c3 = arith.constant 3 : index
    %c0_12 = arith.constant 0 : index
    %c0_13 = arith.constant 0 : index
    %19 = vector.load %arg2[%c3, %c0_12, %c0_13] : memref<12x10x10xf32, #tpu.memory_space<vmem>>, vector<1x10x10xf32>
    %20 = vector.shape_cast %19 : vector<1x10x10xf32> to vector<10x10xf32>
    %21 = vector.extract_strided_slice %20 {offsets = [0, 0], sizes = [10, 2], strides = [1, 1]} : vector<10x10xf32> to vector<10x2xf32>
    %cst_14 = arith.constant dense<0.000000e+00> : vector<10x127xf32>
    %22 = tpu.matmul %18, %1, %cst_14 {dimension_numbers = #tpu.dot_dimension_numbers<[1], [0], [0], [1], [0, 0, 1, 1], [], []>} : vector<10x2xf32>, vector<2x127xf32>, vector<10x127xf32> -> vector<10x127xf32>
    %cst_15 = arith.constant dense<0.000000e+00> : vector<10x127xf32>
    %23 = tpu.matmul %21, %2, %cst_15 {dimension_numbers = #tpu.dot_dimension_numbers<[1], [0], [0], [1], [0, 0, 1, 1], [], []>} : vector<10x2xf32>, vector<2x127xf32>, vector<10x127xf32> -> vector<10x127xf32>
    %24 = arith.addf %22, %23 : vector<10x127xf32>
    %c1_16 = arith.constant 1 : index
    %c0_17 = arith.constant 0 : index
    %c0_18 = arith.constant 0 : index
    %25 = vector.load %arg3[%c1_16, %c0_17, %c0_18] : memref<6x10x1xf32, #tpu.memory_space<vmem>>, vector<1x10x1xf32>
    %26 = vector.shape_cast %25 : vector<1x10x1xf32> to vector<10x1xf32>
    %27 = vector.broadcast %26 : vector<10x1xf32> to vector<10x127xf32>
    %28 = arith.addf %24, %27 : vector<10x127xf32>
    %29 = arith.maximumf %15, %28 : vector<10x127xf32>
    %30 = vector.extract_strided_slice %29 {offsets = [0, 0], sizes = [10, 126], strides = [1, 1]} : vector<10x127xf32> to vector<10x126xf32>
    %31 = vector.extract_strided_slice %29 {offsets = [0, 1], sizes = [10, 126], strides = [1, 1]} : vector<10x127xf32> to vector<10x126xf32>
    %32 = arith.maximumf %30, %31 : vector<10x126xf32>
    %cst_19 = arith.constant 0.000000e+00 : f32
    %33 = vector.broadcast %cst_19 : f32 to vector<10x126xf32>
    %34 = arith.maximumf %32, %33 : vector<10x126xf32>
    %35 = vector.extract_strided_slice %34 {offsets = [0, 0], sizes = [10, 124], strides = [1, 1]} : vector<10x126xf32> to vector<10x124xf32>
    %36 = vector.extract_strided_slice %34 {offsets = [0, 2], sizes = [10, 124], strides = [1, 1]} : vector<10x126xf32> to vector<10x124xf32>
    %c4 = arith.constant 4 : index
    %c0_20 = arith.constant 0 : index
    %c0_21 = arith.constant 0 : index
    %37 = vector.load %arg2[%c4, %c0_20, %c0_21] : memref<12x10x10xf32, #tpu.memory_space<vmem>>, vector<1x10x10xf32>
    %38 = vector.shape_cast %37 : vector<1x10x10xf32> to vector<10x10xf32>
    %c6 = arith.constant 6 : index
    %c0_22 = arith.constant 0 : index
    %c0_23 = arith.constant 0 : index
    %39 = vector.load %arg2[%c6, %c0_22, %c0_23] : memref<12x10x10xf32, #tpu.memory_space<vmem>>, vector<1x10x10xf32>
    %40 = vector.shape_cast %39 : vector<1x10x10xf32> to vector<10x10xf32>
    %cst_24 = arith.constant dense<0.000000e+00> : vector<10x124xf32>
    %41 = tpu.matmul %38, %35, %cst_24 {dimension_numbers = #tpu.dot_dimension_numbers<[1], [0], [0], [1], [0, 0, 1, 1], [], []>} : vector<10x10xf32>, vector<10x124xf32>, vector<10x124xf32> -> vector<10x124xf32>
    %cst_25 = arith.constant dense<0.000000e+00> : vector<10x124xf32>
    %42 = tpu.matmul %40, %36, %cst_25 {dimension_numbers = #tpu.dot_dimension_numbers<[1], [0], [0], [1], [0, 0, 1, 1], [], []>} : vector<10x10xf32>, vector<10x124xf32>, vector<10x124xf32> -> vector<10x124xf32>
    %43 = arith.addf %41, %42 : vector<10x124xf32>
    %c2_26 = arith.constant 2 : index
    %c0_27 = arith.constant 0 : index
    %c0_28 = arith.constant 0 : index
    %44 = vector.load %arg3[%c2_26, %c0_27, %c0_28] : memref<6x10x1xf32, #tpu.memory_space<vmem>>, vector<1x10x1xf32>
    %45 = vector.shape_cast %44 : vector<1x10x1xf32> to vector<10x1xf32>
    %46 = vector.broadcast %45 : vector<10x1xf32> to vector<10x124xf32>
    %47 = arith.addf %43, %46 : vector<10x124xf32>
    %c5 = arith.constant 5 : index
    %c0_29 = arith.constant 0 : index
    %c0_30 = arith.constant 0 : index
    %48 = vector.load %arg2[%c5, %c0_29, %c0_30] : memref<12x10x10xf32, #tpu.memory_space<vmem>>, vector<1x10x10xf32>
    %49 = vector.shape_cast %48 : vector<1x10x10xf32> to vector<10x10xf32>
    %c7 = arith.constant 7 : index
    %c0_31 = arith.constant 0 : index
    %c0_32 = arith.constant 0 : index
    %50 = vector.load %arg2[%c7, %c0_31, %c0_32] : memref<12x10x10xf32, #tpu.memory_space<vmem>>, vector<1x10x10xf32>
    %51 = vector.shape_cast %50 : vector<1x10x10xf32> to vector<10x10xf32>
    %cst_33 = arith.constant dense<0.000000e+00> : vector<10x124xf32>
    %52 = tpu.matmul %49, %35, %cst_33 {dimension_numbers = #tpu.dot_dimension_numbers<[1], [0], [0], [1], [0, 0, 1, 1], [], []>} : vector<10x10xf32>, vector<10x124xf32>, vector<10x124xf32> -> vector<10x124xf32>
    %cst_34 = arith.constant dense<0.000000e+00> : vector<10x124xf32>
    %53 = tpu.matmul %51, %36, %cst_34 {dimension_numbers = #tpu.dot_dimension_numbers<[1], [0], [0], [1], [0, 0, 1, 1], [], []>} : vector<10x10xf32>, vector<10x124xf32>, vector<10x124xf32> -> vector<10x124xf32>
    %54 = arith.addf %52, %53 : vector<10x124xf32>
    %c3_35 = arith.constant 3 : index
    %c0_36 = arith.constant 0 : index
    %c0_37 = arith.constant 0 : index
    %55 = vector.load %arg3[%c3_35, %c0_36, %c0_37] : memref<6x10x1xf32, #tpu.memory_space<vmem>>, vector<1x10x1xf32>
    %56 = vector.shape_cast %55 : vector<1x10x1xf32> to vector<10x1xf32>
    %57 = vector.broadcast %56 : vector<10x1xf32> to vector<10x124xf32>
    %58 = arith.addf %54, %57 : vector<10x124xf32>
    %59 = arith.maximumf %47, %58 : vector<10x124xf32>
    %60 = vector.extract_strided_slice %59 {offsets = [0, 0], sizes = [10, 122], strides = [1, 1]} : vector<10x124xf32> to vector<10x122xf32>
    %61 = vector.extract_strided_slice %59 {offsets = [0, 2], sizes = [10, 122], strides = [1, 1]} : vector<10x124xf32> to vector<10x122xf32>
    %62 = arith.maximumf %60, %61 : vector<10x122xf32>
    %cst_38 = arith.constant 0.000000e+00 : f32
    %63 = vector.broadcast %cst_38 : f32 to vector<10x122xf32>
    %64 = arith.maximumf %62, %63 : vector<10x122xf32>
    %65 = vector.extract_strided_slice %64 {offsets = [0, 0], sizes = [10, 118], strides = [1, 1]} : vector<10x122xf32> to vector<10x118xf32>
    %66 = vector.extract_strided_slice %64 {offsets = [0, 4], sizes = [10, 118], strides = [1, 1]} : vector<10x122xf32> to vector<10x118xf32>
    %c8 = arith.constant 8 : index
    %c0_39 = arith.constant 0 : index
    %c0_40 = arith.constant 0 : index
    %67 = vector.load %arg2[%c8, %c0_39, %c0_40] : memref<12x10x10xf32, #tpu.memory_space<vmem>>, vector<1x10x10xf32>
    %68 = vector.shape_cast %67 : vector<1x10x10xf32> to vector<10x10xf32>
    %c10 = arith.constant 10 : index
    %c0_41 = arith.constant 0 : index
    %c0_42 = arith.constant 0 : index
    %69 = vector.load %arg2[%c10, %c0_41, %c0_42] : memref<12x10x10xf32, #tpu.memory_space<vmem>>, vector<1x10x10xf32>
    %70 = vector.shape_cast %69 : vector<1x10x10xf32> to vector<10x10xf32>
    %cst_43 = arith.constant dense<0.000000e+00> : vector<10x118xf32>
    %71 = tpu.matmul %68, %65, %cst_43 {dimension_numbers = #tpu.dot_dimension_numbers<[1], [0], [0], [1], [0, 0, 1, 1], [], []>} : vector<10x10xf32>, vector<10x118xf32>, vector<10x118xf32> -> vector<10x118xf32>
    %cst_44 = arith.constant dense<0.000000e+00> : vector<10x118xf32>
    %72 = tpu.matmul %70, %66, %cst_44 {dimension_numbers = #tpu.dot_dimension_numbers<[1], [0], [0], [1], [0, 0, 1, 1], [], []>} : vector<10x10xf32>, vector<10x118xf32>, vector<10x118xf32> -> vector<10x118xf32>
    %73 = arith.addf %71, %72 : vector<10x118xf32>
    %c4_45 = arith.constant 4 : index
    %c0_46 = arith.constant 0 : index
    %c0_47 = arith.constant 0 : index
    %74 = vector.load %arg3[%c4_45, %c0_46, %c0_47] : memref<6x10x1xf32, #tpu.memory_space<vmem>>, vector<1x10x1xf32>
    %75 = vector.shape_cast %74 : vector<1x10x1xf32> to vector<10x1xf32>
    %76 = vector.broadcast %75 : vector<10x1xf32> to vector<10x118xf32>
    %77 = arith.addf %73, %76 : vector<10x118xf32>
    %c9 = arith.constant 9 : index
    %c0_48 = arith.constant 0 : index
    %c0_49 = arith.constant 0 : index
    %78 = vector.load %arg2[%c9, %c0_48, %c0_49] : memref<12x10x10xf32, #tpu.memory_space<vmem>>, vector<1x10x10xf32>
    %79 = vector.shape_cast %78 : vector<1x10x10xf32> to vector<10x10xf32>
    %c11 = arith.constant 11 : index
    %c0_50 = arith.constant 0 : index
    %c0_51 = arith.constant 0 : index
    %80 = vector.load %arg2[%c11, %c0_50, %c0_51] : memref<12x10x10xf32, #tpu.memory_space<vmem>>, vector<1x10x10xf32>
    %81 = vector.shape_cast %80 : vector<1x10x10xf32> to vector<10x10xf32>
    %cst_52 = arith.constant dense<0.000000e+00> : vector<10x118xf32>
    %82 = tpu.matmul %79, %65, %cst_52 {dimension_numbers = #tpu.dot_dimension_numbers<[1], [0], [0], [1], [0, 0, 1, 1], [], []>} : vector<10x10xf32>, vector<10x118xf32>, vector<10x118xf32> -> vector<10x118xf32>
    %cst_53 = arith.constant dense<0.000000e+00> : vector<10x118xf32>
    %83 = tpu.matmul %81, %66, %cst_53 {dimension_numbers = #tpu.dot_dimension_numbers<[1], [0], [0], [1], [0, 0, 1, 1], [], []>} : vector<10x10xf32>, vector<10x118xf32>, vector<10x118xf32> -> vector<10x118xf32>
    %84 = arith.addf %82, %83 : vector<10x118xf32>
    %c5_54 = arith.constant 5 : index
    %c0_55 = arith.constant 0 : index
    %c0_56 = arith.constant 0 : index
    %85 = vector.load %arg3[%c5_54, %c0_55, %c0_56] : memref<6x10x1xf32, #tpu.memory_space<vmem>>, vector<1x10x1xf32>
    %86 = vector.shape_cast %85 : vector<1x10x1xf32> to vector<10x1xf32>
    %87 = vector.broadcast %86 : vector<10x1xf32> to vector<10x118xf32>
    %88 = arith.addf %84, %87 : vector<10x118xf32>
    %89 = arith.maximumf %77, %88 : vector<10x118xf32>
    %90 = vector.extract_strided_slice %89 {offsets = [0, 0], sizes = [10, 114], strides = [1, 1]} : vector<10x118xf32> to vector<10x114xf32>
    %91 = vector.extract_strided_slice %89 {offsets = [0, 4], sizes = [10, 114], strides = [1, 1]} : vector<10x118xf32> to vector<10x114xf32>
    %92 = arith.maximumf %90, %91 : vector<10x114xf32>
    %cst_57 = arith.constant 0.000000e+00 : f32
    %93 = vector.broadcast %cst_57 : f32 to vector<10x114xf32>
    %94 = arith.maximumf %92, %93 : vector<10x114xf32>
    %c0_58 = arith.constant 0 : index
    %c0_59 = arith.constant 0 : index
    %95 = vector.load %arg4[%c0_58, %c0_59] : memref<10x128xf32, #tpu.memory_space<vmem>>, vector<10x114xf32>
    tpu.vector_store %arg4[%c0_58, %c0_59], %94 {strides = array<i32>} : memref<10x128xf32, #tpu.memory_space<vmem>>, vector<10x114xf32>,
    return
  }
  func.func @transform_0(%arg0: i32) -> (i32, i32) {
    %c0_i32 = arith.constant 0 : i32
    %c0_i32_0 = arith.constant 0 : i32
    return %c0_i32, %arg0 : i32, i32
  }
  func.func @transform_1(%arg0: i32) -> (i32, i32, i32) {
    %c0_i32 = arith.constant 0 : i32
    %c0_i32_0 = arith.constant 0 : i32
    %c0_i32_1 = arith.constant 0 : i32
    %c0_i32_2 = arith.constant 0 : i32
    return %c0_i32, %c0_i32_0, %c0_i32_1 : i32, i32, i32
  }
  func.func @transform_2(%arg0: i32) -> (i32, i32, i32) {
    %c0_i32 = arith.constant 0 : i32
    %c0_i32_0 = arith.constant 0 : i32
    %c0_i32_1 = arith.constant 0 : i32
    %c0_i32_2 = arith.constant 0 : i32
    return %c0_i32, %c0_i32_0, %c0_i32_1 : i32, i32, i32
  }
  func.func @transform_3(%arg0: i32) -> (i32, i32) {
    %c0_i32 = arith.constant 0 : i32
    %c0_i32_0 = arith.constant 0 : i32
    return %c0_i32, %arg0 : i32, i32
  }
}

</mosaic_0001>

<llo_original>
// kernel: cnn_forward.1
$region0: #{cnn_forward.1}
  #allocation0 [shape = 'u32[]', space=smem, size = 0x4, offset = 0x4, fixed_abs, tag = 'smem constant byte address 0x4 - core index']
  #allocation1 [shape = 'u32[144,128]{1,0:T(1,128)}', space=vmem, size = 0x12000, scoped, tag = 'internal scratch']
  %s0 = inlined_call_operand.vmem [shape: f32[2,128], index: 0, kind: input, shape index: {}]
  %s1 = inlined_call_operand.vmem [shape: f32[12,10,10], index: 1, kind: input, shape index: {}]
  %s2 = inlined_call_operand.vmem [shape: f32[6,10,1], index: 2, kind: input, shape index: {}]
  %s3 = inlined_call_operand.vmem [shape: f32[10,128], index: 3, kind: output, shape index: {}]
  %s4 = sld [smem:[#allocation0]]
  $region22: #{cnn_forward.1} parent=0
    _
  %s6 = ssub.s32 1, %s4
  %s7 = scalar_select 0, %s6, %s4
  // Predicated region
  $region2: #{cnn_forward.1} parent=0 // pred_check
    _
  $region3: #{cnn_forward.1} parent=0 // pred_check_branch
    %9 = sbr.rel (0) target = $region5
  $region4: #{cnn_forward.1} parent=0 // pred_region
    _
  $region5: #{cnn_forward.1} parent=0 // pred_fallthru
    _
  // Predicated region
  $region6: #{cnn_forward.1} parent=0 // pred_check
    _
  $region7: #{cnn_forward.1} parent=0 // pred_check_branch
    %11 = sbr.rel (0) target = $region9
  $region8: #{cnn_forward.1} parent=0 // pred_region
    _
  $region9: #{cnn_forward.1} parent=0 // pred_fallthru
    _
  // Predicated region
  $region10: #{cnn_forward.1} parent=0 // pred_check
    _
  $region11: #{cnn_forward.1} parent=0 // pred_check_branch
    %13 = sbr.rel (0) target = $region13
  $region12: #{cnn_forward.1} parent=0 // pred_region
    _
  $region13: #{cnn_forward.1} parent=0 // pred_fallthru
    _
  %v14 = vld [vmem:[%s0] sm:$0x3]
  %v15 = vld [vmem:[%s1] sm:$0xff]
  %v16 = vld [vmem:[%s1 + $0x8] sm:$0x3]
  %s17 = scalar_lea.vmem %s1, 32
  %v18 = vld [vmem:[%s17] sm:$0xff]
  %v19 = vld [vmem:[%s17 + $0x8] sm:$0x3]
  %21 = vrot.lane.b32.xlu0 %v14, 127
  %v22 = vpop.permute.xlu0 %21
  %vm23 = vcmask 15360
  %v25 = vsel %vm23, %v18, 0
  %v28 = vsel %vm23, %v19, 0
  %vm30 = vcmask 1041408
  %v31 = vsel %vm30, %v22, 0
  %33 = vmatprep.subr.mxu0 0.0
  %34 = vmatpush1.msra.mxu0 0.0
  %35 = vmatprep.subr.mxu0 0.0
  %36 = vmatpush1.msra.mxu0 0.0
  %37 = vmatprep.subr.mxu0 0.0
  %38 = vmatpush1.msra.mxu0 0.0
  %39 = vmatprep.subr.mxu0 0.0
  %40 = vmatpush1.msra.mxu0 0.0
  %41 = vmatprep.subr.mxu0 0.0
  %42 = vmatpush1.msra.mxu0 0.0
  %43 = vmatprep.subr.mxu0 0.0
  %44 = vmatpush1.msra.mxu0 0.0
  %45 = vmatprep.subr.mxu0 0.0
  %46 = vmatpush1.msra.mxu0 0.0
  %47 = vmatprep.subr.mxu0 0.0
  %48 = vmatpush1.msra.mxu0 0.0
  %49 = vmatprep.subr.mxu0 0.0
  %50 = vmatpush1.msra.mxu0 0.0
  %51 = vmatprep.subr.mxu0 0.0
  %52 = vmatpush1.msra.mxu0 0.0
  %53 = vmatprep.subr.mxu0 0.0
  %54 = vmatpush1.msra.mxu0 0.0
  %55 = vmatprep.subr.mxu0 0.0
  %56 = vmatpush1.msra.mxu0 0.0
  %57 = vmatprep.subr.mxu0 0.0
  %58 = vmatpush1.msra.mxu0 0.0
  %59 = vmatprep.subr.mxu0 0.0
  %60 = vmatpush1.msra.mxu0 0.0
  %61 = vmatprep.subr.mxu0 0.0
  %62 = vmatpush1.msra.mxu0 0.0
  %63 = vmatprep.subr.mxu0 0.0
  %64 = vmatpush1.msra.mxu0 %v31
  %65 = vmatprep.subr.mxu0 0.0
  %66 = vmatpush2.msra.mxu0 0.0
  %67 = vmatprep.subr.mxu0 0.0
  %68 = vmatpush2.msra.mxu0 0.0
  %69 = vmatprep.subr.mxu0 0.0
  %70 = vmatpush2.msra.mxu0 0.0
  %71 = vmatprep.subr.mxu0 0.0
  %72 = vmatpush2.msra.mxu0 0.0
  %73 = vmatprep.subr.mxu0 0.0
  %74 = vmatpush2.msra.mxu0 0.0
  %75 = vmatprep.subr.mxu0 0.0
  %76 = vmatpush2.msra.mxu0 0.0
  %77 = vmatprep.subr.mxu0 0.0
  %78 = vmatpush2.msra.mxu0 0.0
  %79 = vmatprep.subr.mxu0 0.0
  %80 = vmatpush2.msra.mxu0 0.0
  %81 = vmatprep.subr.mxu0 0.0
  %82 = vmatpush2.msra.mxu0 0.0
  %83 = vmatprep.subr.mxu0 0.0
  %84 = vmatpush2.msra.mxu0 0.0
  %85 = vmatprep.subr.mxu0 0.0
  %86 = vmatpush2.msra.mxu0 0.0
  %87 = vmatprep.subr.mxu0 0.0
  %88 = vmatpush2.msra.mxu0 0.0
  %89 = vmatprep.subr.mxu0 0.0
  %90 = vmatpush2.msra.mxu0 0.0
  %91 = vmatprep.subr.mxu0 0.0
  %92 = vmatpush2.msra.mxu0 0.0
  %93 = vmatprep.subr.mxu0 0.0
  %94 = vmatpush2.msra.mxu0 0.0
  %95 = vmatprep.subr.mxu0 0.0
  %96 = vmatpush2.msra.mxu0 0.0
  %97 = vmatprep.mubr.f32.mxu0 0.0
  %98 = vmatmul.mubr.f32.gmra.mxu0 %v25
  %v99 = vpop.f32.mrf.mxu0
  %v100 = vadd.f32 0.0, %v99
  %v101 = vpop.f32.mrf.mxu0
  %102 = vmatprep.mubr.f32.mxu0 0.0
  %103 = vmatmul.mubr.f32.gmra.mxu0 %v28
  %v104 = vpop.f32.mrf.mxu0
  %v105 = vadd.f32 0.0, %v104
  %v106 = vpop.f32.mrf.mxu0
  %107 = vdwg.mxu0
  %v109 = vsel %vm23, %v15, 0
  %v112 = vsel %vm23, %v16, 0
  %v114 = vsel %vm30, %v14, 0
  %116 = vmatprep.subr.mxu0 0.0
  %117 = vmatpush1.msra.mxu0 0.0
  %118 = vmatprep.subr.mxu0 0.0
  %119 = vmatpush1.msra.mxu0 0.0
  %120 = vmatprep.subr.mxu0 0.0
  %121 = vmatpush1.msra.mxu0 0.0
  %122 = vmatprep.subr.mxu0 0.0
  %123 = vmatpush1.msra.mxu0 0.0
  %124 = vmatprep.subr.mxu0 0.0
  %125 = vmatpush1.msra.mxu0 0.0
  %126 = vmatprep.subr.mxu0 0.0
  %127 = vmatpush1.msra.mxu0 0.0
  %128 = vmatprep.subr.mxu0 0.0
  %129 = vmatpush1.msra.mxu0 0.0
  %130 = vmatprep.subr.mxu0 0.0
  %131 = vmatpush1.msra.mxu0 0.0
  %132 = vmatprep.subr.mxu0 0.0
  %133 = vmatpush1.msra.mxu0 0.0
  %134 = vmatprep.subr.mxu0 0.0
  %135 = vmatpush1.msra.mxu0 0.0
  %136 = vmatprep.subr.mxu0 0.0
  %137 = vmatpush1.msra.mxu0 0.0
  %138 = vmatprep.subr.mxu0 0.0
  %139 = vmatpush1.msra.mxu0 0.0
  %140 = vmatprep.subr.mxu0 0.0
  %141 = vmatpush1.msra.mxu0 0.0
  %142 = vmatprep.subr.mxu0 0.0
  %143 = vmatpush1.msra.mxu0 0.0
  %144 = vmatprep.subr.mxu0 0.0
  %145 = vmatpush1.msra.mxu0 0.0
  %146 = vmatprep.subr.mxu0 0.0
  %147 = vmatpush1.msra.mxu0 %v114
  %148 = vmatprep.subr.mxu0 0.0
  %149 = vmatpush2.msra.mxu0 0.0
  %150 = vmatprep.subr.mxu0 0.0
  %151 = vmatpush2.msra.mxu0 0.0
  %152 = vmatprep.subr.mxu0 0.0
  %153 = vmatpush2.msra.mxu0 0.0
  %154 = vmatprep.subr.mxu0 0.0
  %155 = vmatpush2.msra.mxu0 0.0
  %156 = vmatprep.subr.mxu0 0.0
  %157 = vmatpush2.msra.mxu0 0.0
  %158 = vmatprep.subr.mxu0 0.0
  %159 = vmatpush2.msra.mxu0 0.0
  %160 = vmatprep.subr.mxu0 0.0
  %161 = vmatpush2.msra.mxu0 0.0
  %162 = vmatprep.subr.mxu0 0.0
  %163 = vmatpush2.msra.mxu0 0.0
  %164 = vmatprep.subr.mxu0 0.0
  %165 = vmatpush2.msra.mxu0 0.0
  %166 = vmatprep.subr.mxu0 0.0
  %167 = vmatpush2.msra.mxu0 0.0
  %168 = vmatprep.subr.mxu0 0.0
  %169 = vmatpush2.msra.mxu0 0.0
  %170 = vmatprep.subr.mxu0 0.0
  %171 = vmatpush2.msra.mxu0 0.0
  %172 = vmatprep.subr.mxu0 0.0
  %173 = vmatpush2.msra.mxu0 0.0
  %174 = vmatprep.subr.mxu0 0.0
  %175 = vmatpush2.msra.mxu0 0.0
  %176 = vmatprep.subr.mxu0 0.0
  %177 = vmatpush2.msra.mxu0 0.0
  %178 = vmatprep.subr.mxu0 0.0
  %179 = vmatpush2.msra.mxu0 0.0
  %180 = vmatprep.mubr.f32.mxu0 0.0
  %181 = vmatmul.mubr.f32.gmra.mxu0 %v109
  %v182 = vpop.f32.mrf.mxu0
  %v183 = vadd.f32 %v100, %v182
  %v184 = vpop.f32.mrf.mxu0
  %185 = vmatprep.mubr.f32.mxu0 0.0
  %186 = vmatmul.mubr.f32.gmra.mxu0 %v112
  %v187 = vpop.f32.mrf.mxu0
  %v188 = vadd.f32 %v105, %v187
  %v189 = vpop.f32.mrf.mxu0
  %190 = vdwg.mxu0
  %v191 = vld [vmem:[%s2] sm:$0xff]
  %v192 = vld [vmem:[%s2 + $0x8] sm:$0x3]
  %194 = vset.pattern.permute.xlu0 0
  %195 = vperm.xlu0 %194, %v191
  %v196 = vpop.permute.xlu0 %195
  %199 = vset.pattern.permute.xlu0 0
  %200 = vperm.xlu0 %199, %v192
  %v201 = vpop.permute.xlu0 %200
  %v203 = vadd.f32 %v183, %v196
  %v204 = vadd.f32 %v188, %v201
  %s205 = scalar_lea.vmem %s1, 16
  %v206 = vld [vmem:[%s205] sm:$0xff]
  %v207 = vld [vmem:[%s205 + $0x8] sm:$0x3]
  %s208 = scalar_lea.vmem %s1, 48
  %v209 = vld [vmem:[%s208] sm:$0xff]
  %v210 = vld [vmem:[%s208 + $0x8] sm:$0x3]
  %v212 = vsel %vm23, %v209, 0
  %v215 = vsel %vm23, %v210, 0
  %217 = vmatprep.subr.mxu0 0.0
  %218 = vmatpush1.msra.mxu0 0.0
  %219 = vmatprep.subr.mxu0 0.0
  %220 = vmatpush1.msra.mxu0 0.0
  %221 = vmatprep.subr.mxu0 0.0
  %222 = vmatpush1.msra.mxu0 0.0
  %223 = vmatprep.subr.mxu0 0.0
  %224 = vmatpush1.msra.mxu0 0.0
  %225 = vmatprep.subr.mxu0 0.0
  %226 = vmatpush1.msra.mxu0 0.0
  %227 = vmatprep.subr.mxu0 0.0
  %228 = vmatpush1.msra.mxu0 0.0
  %229 = vmatprep.subr.mxu0 0.0
  %230 = vmatpush1.msra.mxu0 0.0
  %231 = vmatprep.subr.mxu0 0.0
  %232 = vmatpush1.msra.mxu0 0.0
  %233 = vmatprep.subr.mxu0 0.0
  %234 = vmatpush1.msra.mxu0 0.0
  %235 = vmatprep.subr.mxu0 0.0
  %236 = vmatpush1.msra.mxu0 0.0
  %237 = vmatprep.subr.mxu0 0.0
  %238 = vmatpush1.msra.mxu0 0.0
  %239 = vmatprep.subr.mxu0 0.0
  %240 = vmatpush1.msra.mxu0 0.0
  %241 = vmatprep.subr.mxu0 0.0
  %242 = vmatpush1.msra.mxu0 0.0
  %243 = vmatprep.subr.mxu0 0.0
  %244 = vmatpush1.msra.mxu0 0.0
  %245 = vmatprep.subr.mxu0 0.0
  %246 = vmatpush1.msra.mxu0 0.0
  %247 = vmatprep.subr.mxu0 0.0
  %248 = vmatpush1.msra.mxu0 %v31
  %249 = vmatprep.subr.mxu0 0.0
  %250 = vmatpush2.msra.mxu0 0.0
  %251 = vmatprep.subr.mxu0 0.0
  %252 = vmatpush2.msra.mxu0 0.0
  %253 = vmatprep.subr.mxu0 0.0
  %254 = vmatpush2.msra.mxu0 0.0
  %255 = vmatprep.subr.mxu0 0.0
  %256 = vmatpush2.msra.mxu0 0.0
  %257 = vmatprep.subr.mxu0 0.0
  %258 = vmatpush2.msra.mxu0 0.0
  %259 = vmatprep.subr.mxu0 0.0
  %260 = vmatpush2.msra.mxu0 0.0
  %261 = vmatprep.subr.mxu0 0.0
  %262 = vmatpush2.msra.mxu0 0.0
  %263 = vmatprep.subr.mxu0 0.0
  %264 = vmatpush2.msra.mxu0 0.0
  %265 = vmatprep.subr.mxu0 0.0
  %266 = vmatpush2.msra.mxu0 0.0
  %267 = vmatprep.subr.mxu0 0.0
  %268 = vmatpush2.msra.mxu0 0.0
  %269 = vmatprep.subr.mxu0 0.0
  %270 = vmatpush2.msra.mxu0 0.0
  %271 = vmatprep.subr.mxu0 0.0
  %272 = vmatpush2.msra.mxu0 0.0
  %273 = vmatprep.subr.mxu0 0.0
  %274 = vmatpush2.msra.mxu0 0.0
  %275 = vmatprep.subr.mxu0 0.0
  %276 = vmatpush2.msra.mxu0 0.0
  %277 = vmatprep.subr.mxu0 0.0
  %278 = vmatpush2.msra.mxu0 0.0
  %279 = vmatprep.subr.mxu0 0.0
  %280 = vmatpush2.msra.mxu0 0.0
  %281 = vmatprep.mubr.f32.mxu0 0.0
  %282 = vmatmul.mubr.f32.gmra.mxu0 %v212
  %v283 = vpop.f32.mrf.mxu0
  %v284 = vadd.f32 0.0, %v283
  %v285 = vpop.f32.mrf.mxu0
  %286 = vmatprep.mubr.f32.mxu0 0.0
  %287 = vmatmul.mubr.f32.gmra.mxu0 %v215
  %v288 = vpop.f32.mrf.mxu0
  %v289 = vadd.f32 0.0, %v288
  %v290 = vpop.f32.mrf.mxu0
  %291 = vdwg.mxu0
  %v293 = vsel %vm23, %v206, 0
  %v296 = vsel %vm23, %v207, 0
  %298 = vmatprep.subr.mxu0 0.0
  %299 = vmatpush1.msra.mxu0 0.0
  %300 = vmatprep.subr.mxu0 0.0
  %301 = vmatpush1.msra.mxu0 0.0
  %302 = vmatprep.subr.mxu0 0.0
  %303 = vmatpush1.msra.mxu0 0.0
  %304 = vmatprep.subr.mxu0 0.0
  %305 = vmatpush1.msra.mxu0 0.0
  %306 = vmatprep.subr.mxu0 0.0
  %307 = vmatpush1.msra.mxu0 0.0
  %308 = vmatprep.subr.mxu0 0.0
  %309 = vmatpush1.msra.mxu0 0.0
  %310 = vmatprep.subr.mxu0 0.0
  %311 = vmatpush1.msra.mxu0 0.0
  %312 = vmatprep.subr.mxu0 0.0
  %313 = vmatpush1.msra.mxu0 0.0
  %314 = vmatprep.subr.mxu0 0.0
  %315 = vmatpush1.msra.mxu0 0.0
  %316 = vmatprep.subr.mxu0 0.0
  %317 = vmatpush1.msra.mxu0 0.0
  %318 = vmatprep.subr.mxu0 0.0
  %319 = vmatpush1.msra.mxu0 0.0
  %320 = vmatprep.subr.mxu0 0.0
  %321 = vmatpush1.msra.mxu0 0.0
  %322 = vmatprep.subr.mxu0 0.0
  %323 = vmatpush1.msra.mxu0 0.0
  %324 = vmatprep.subr.mxu0 0.0
  %325 = vmatpush1.msra.mxu0 0.0
  %326 = vmatprep.subr.mxu0 0.0
  %327 = vmatpush1.msra.mxu0 0.0
  %328 = vmatprep.subr.mxu0 0.0
  %329 = vmatpush1.msra.mxu0 %v114
  %330 = vmatprep.subr.mxu0 0.0
  %331 = vmatpush2.msra.mxu0 0.0
  %332 = vmatprep.subr.mxu0 0.0
  %333 = vmatpush2.msra.mxu0 0.0
  %334 = vmatprep.subr.mxu0 0.0
  %335 = vmatpush2.msra.mxu0 0.0
  %336 = vmatprep.subr.mxu0 0.0
  %337 = vmatpush2.msra.mxu0 0.0
  %338 = vmatprep.subr.mxu0 0.0
  %339 = vmatpush2.msra.mxu0 0.0
  %340 = vmatprep.subr.mxu0 0.0
  %341 = vmatpush2.msra.mxu0 0.0
  %342 = vmatprep.subr.mxu0 0.0
  %343 = vmatpush2.msra.mxu0 0.0
  %344 = vmatprep.subr.mxu0 0.0
  %345 = vmatpush2.msra.mxu0 0.0
  %346 = vmatprep.subr.mxu0 0.0
  %347 = vmatpush2.msra.mxu0 0.0
  %348 = vmatprep.subr.mxu0 0.0
  %349 = vmatpush2.msra.mxu0 0.0
  %350 = vmatprep.subr.mxu0 0.0
  %351 = vmatpush2.msra.mxu0 0.0
  %352 = vmatprep.subr.mxu0 0.0
  %353 = vmatpush2.msra.mxu0 0.0
  %354 = vmatprep.subr.mxu0 0.0
  %355 = vmatpush2.msra.mxu0 0.0
  %356 = vmatprep.subr.mxu0 0.0
  %357 = vmatpush2.msra.mxu0 0.0
  %358 = vmatprep.subr.mxu0 0.0
  %359 = vmatpush2.msra.mxu0 0.0
  %360 = vmatprep.subr.mxu0 0.0
  %361 = vmatpush2.msra.mxu0 0.0
  %362 = vmatprep.mubr.f32.mxu0 0.0
  %363 = vmatmul.mubr.f32.gmra.mxu0 %v293
  %v364 = vpop.f32.mrf.mxu0
  %v365 = vadd.f32 %v284, %v364
  %v366 = vpop.f32.mrf.mxu0
  %367 = vmatprep.mubr.f32.mxu0 0.0
  %368 = vmatmul.mubr.f32.gmra.mxu0 %v296
  %v369 = vpop.f32.mrf.mxu0
  %v370 = vadd.f32 %v289, %v369
  %v371 = vpop.f32.mrf.mxu0
  %372 = vdwg.mxu0
  %s373 = scalar_lea.vmem %s2, 16
  %v374 = vld [vmem:[%s373] sm:$0xff]
  %v375 = vld [vmem:[%s373 + $0x8] sm:$0x3]
  %377 = vset.pattern.permute.xlu0 0
  %378 = vperm.xlu0 %377, %v374
  %v379 = vpop.permute.xlu0 %378
  %382 = vset.pattern.permute.xlu0 0
  %383 = vperm.xlu0 %382, %v375
  %v384 = vpop.permute.xlu0 %383
  %v386 = vadd.f32 %v365, %v379
  %v387 = vadd.f32 %v370, %v384
  %v388 = vmax.f32 %v203, %v386
  %v389 = vmax.f32 %v204, %v387
  %392 = vrot.lane.b32.xlu0 %v388, 127
  %v393 = vpop.permute.xlu0 %392
  %394 = vrot.lane.b32.xlu0 %v389, 127
  %v395 = vpop.permute.xlu0 %394
  %v398 = vmax.f32 %v388, %v393
  %v399 = vmax.f32 %v389, %v395
  %v400 = vmax.f32 %v398, 0.0
  %v401 = vmax.f32 %v399, 0.0
  %s402 = scalar_lea.vmem %s1, 64
  %v403 = vld [vmem:[%s402] sm:$0xff]
  %v404 = vld [vmem:[%s402 + $0x8] sm:$0x3]
  %s405 = scalar_lea.vmem %s1, 96
  %v406 = vld [vmem:[%s405] sm:$0xff]
  %v407 = vld [vmem:[%s405 + $0x8] sm:$0x3]
  %410 = vrot.lane.b32.xlu0 %v400, 126
  %v411 = vpop.permute.xlu0 %410
  %412 = vrot.lane.b32.xlu0 %v401, 126
  %v413 = vpop.permute.xlu0 %412
  %vm415 = vcmask 80896
  %v417 = vsel %vm415, %v406, 0
  %v420 = vsel %vm415, %v407, 0
  %v422 = vsel %vm30, %v413, 0
  %424 = vmatprep.subr.mxu0 0.0
  %425 = vmatpush1.msra.mxu0 0.0
  %426 = vmatprep.subr.mxu0 0.0
  %427 = vmatpush1.msra.mxu0 0.0
  %428 = vmatprep.subr.mxu0 0.0
  %429 = vmatpush1.msra.mxu0 0.0
  %430 = vmatprep.subr.mxu0 0.0
  %431 = vmatpush1.msra.mxu0 0.0
  %432 = vmatprep.subr.mxu0 0.0
  %433 = vmatpush1.msra.mxu0 0.0
  %434 = vmatprep.subr.mxu0 0.0
  %435 = vmatpush1.msra.mxu0 0.0
  %436 = vmatprep.subr.mxu0 0.0
  %437 = vmatpush1.msra.mxu0 0.0
  %438 = vmatprep.subr.mxu0 0.0
  %439 = vmatpush1.msra.mxu0 0.0
  %440 = vmatprep.subr.mxu0 0.0
  %441 = vmatpush1.msra.mxu0 0.0
  %442 = vmatprep.subr.mxu0 0.0
  %443 = vmatpush1.msra.mxu0 0.0
  %444 = vmatprep.subr.mxu0 0.0
  %445 = vmatpush1.msra.mxu0 0.0
  %446 = vmatprep.subr.mxu0 0.0
  %447 = vmatpush1.msra.mxu0 0.0
  %448 = vmatprep.subr.mxu0 0.0
  %449 = vmatpush1.msra.mxu0 0.0
  %450 = vmatprep.subr.mxu0 0.0
  %451 = vmatpush1.msra.mxu0 0.0
  %452 = vmatprep.subr.mxu0 0.0
  %453 = vmatpush1.msra.mxu0 %v422
  %454 = vmatprep.subr.mxu0 0.0
  %455 = vmatpush1.msra.mxu0 %v411
  %456 = vmatprep.subr.mxu0 0.0
  %457 = vmatpush2.msra.mxu0 0.0
  %458 = vmatprep.subr.mxu0 0.0
  %459 = vmatpush2.msra.mxu0 0.0
  %460 = vmatprep.subr.mxu0 0.0
  %461 = vmatpush2.msra.mxu0 0.0
  %462 = vmatprep.subr.mxu0 0.0
  %463 = vmatpush2.msra.mxu0 0.0
  %464 = vmatprep.subr.mxu0 0.0
  %465 = vmatpush2.msra.mxu0 0.0
  %466 = vmatprep.subr.mxu0 0.0
  %467 = vmatpush2.msra.mxu0 0.0
  %468 = vmatprep.subr.mxu0 0.0
  %469 = vmatpush2.msra.mxu0 0.0
  %470 = vmatprep.subr.mxu0 0.0
  %471 = vmatpush2.msra.mxu0 0.0
  %472 = vmatprep.subr.mxu0 0.0
  %473 = vmatpush2.msra.mxu0 0.0
  %474 = vmatprep.subr.mxu0 0.0
  %475 = vmatpush2.msra.mxu0 0.0
  %476 = vmatprep.subr.mxu0 0.0
  %477 = vmatpush2.msra.mxu0 0.0
  %478 = vmatprep.subr.mxu0 0.0
  %479 = vmatpush2.msra.mxu0 0.0
  %480 = vmatprep.subr.mxu0 0.0
  %481 = vmatpush2.msra.mxu0 0.0
  %482 = vmatprep.subr.mxu0 0.0
  %483 = vmatpush2.msra.mxu0 0.0
  %484 = vmatprep.subr.mxu0 0.0
  %485 = vmatpush2.msra.mxu0 0.0
  %486 = vmatprep.subr.mxu0 0.0
  %487 = vmatpush2.msra.mxu0 0.0
  %488 = vmatprep.mubr.f32.mxu0 0.0
  %489 = vmatmul.mubr.f32.gmra.mxu0 %v417
  %v490 = vpop.f32.mrf.mxu0
  %v491 = vadd.f32 0.0, %v490
  %v492 = vpop.f32.mrf.mxu0
  %493 = vmatprep.mubr.f32.mxu0 0.0
  %494 = vmatmul.mubr.f32.gmra.mxu0 %v420
  %v495 = vpop.f32.mrf.mxu0
  %v496 = vadd.f32 0.0, %v495
  %v497 = vpop.f32.mrf.mxu0
  %498 = vdwg.mxu0
  %v500 = vsel %vm415, %v403, 0
  %v503 = vsel %vm415, %v404, 0
  %v505 = vsel %vm30, %v401, 0
  %507 = vmatprep.subr.mxu0 0.0
  %508 = vmatpush1.msra.mxu0 0.0
  %509 = vmatprep.subr.mxu0 0.0
  %510 = vmatpush1.msra.mxu0 0.0
  %511 = vmatprep.subr.mxu0 0.0
  %512 = vmatpush1.msra.mxu0 0.0
  %513 = vmatprep.subr.mxu0 0.0
  %514 = vmatpush1.msra.mxu0 0.0
  %515 = vmatprep.subr.mxu0 0.0
  %516 = vmatpush1.msra.mxu0 0.0
  %517 = vmatprep.subr.mxu0 0.0
  %518 = vmatpush1.msra.mxu0 0.0
  %519 = vmatprep.subr.mxu0 0.0
  %520 = vmatpush1.msra.mxu0 0.0
  %521 = vmatprep.subr.mxu0 0.0
  %522 = vmatpush1.msra.mxu0 0.0
  %523 = vmatprep.subr.mxu0 0.0
  %524 = vmatpush1.msra.mxu0 0.0
  %525 = vmatprep.subr.mxu0 0.0
  %526 = vmatpush1.msra.mxu0 0.0
  %527 = vmatprep.subr.mxu0 0.0
  %528 = vmatpush1.msra.mxu0 0.0
  %529 = vmatprep.subr.mxu0 0.0
  %530 = vmatpush1.msra.mxu0 0.0
  %531 = vmatprep.subr.mxu0 0.0
  %532 = vmatpush1.msra.mxu0 0.0
  %533 = vmatprep.subr.mxu0 0.0
  %534 = vmatpush1.msra.mxu0 0.0
  %535 = vmatprep.subr.mxu0 0.0
  %536 = vmatpush1.msra.mxu0 %v505
  %537 = vmatprep.subr.mxu0 0.0
  %538 = vmatpush1.msra.mxu0 %v400
  %539 = vmatprep.subr.mxu0 0.0
  %540 = vmatpush2.msra.mxu0 0.0
  %541 = vmatprep.subr.mxu0 0.0
  %542 = vmatpush2.msra.mxu0 0.0
  %543 = vmatprep.subr.mxu0 0.0
  %544 = vmatpush2.msra.mxu0 0.0
  %545 = vmatprep.subr.mxu0 0.0
  %546 = vmatpush2.msra.mxu0 0.0
  %547 = vmatprep.subr.mxu0 0.0
  %548 = vmatpush2.msra.mxu0 0.0
  %549 = vmatprep.subr.mxu0 0.0
  %550 = vmatpush2.msra.mxu0 0.0
  %551 = vmatprep.subr.mxu0 0.0
  %552 = vmatpush2.msra.mxu0 0.0
  %553 = vmatprep.subr.mxu0 0.0
  %554 = vmatpush2.msra.mxu0 0.0
  %555 = vmatprep.subr.mxu0 0.0
  %556 = vmatpush2.msra.mxu0 0.0
  %557 = vmatprep.subr.mxu0 0.0
  %558 = vmatpush2.msra.mxu0 0.0
  %559 = vmatprep.subr.mxu0 0.0
  %560 = vmatpush2.msra.mxu0 0.0
  %561 = vmatprep.subr.mxu0 0.0
  %562 = vmatpush2.msra.mxu0 0.0
  %563 = vmatprep.subr.mxu0 0.0
  %564 = vmatpush2.msra.mxu0 0.0
  %565 = vmatprep.subr.mxu0 0.0
  %566 = vmatpush2.msra.mxu0 0.0
  %567 = vmatprep.subr.mxu0 0.0
  %568 = vmatpush2.msra.mxu0 0.0
  %569 = vmatprep.subr.mxu0 0.0
  %570 = vmatpush2.msra.mxu0 0.0
  %571 = vmatprep.mubr.f32.mxu0 0.0
  %572 = vmatmul.mubr.f32.gmra.mxu0 %v500
  %v573 = vpop.f32.mrf.mxu0
  %v574 = vadd.f32 %v491, %v573
  %v575 = vpop.f32.mrf.mxu0
  %576 = vmatprep.mubr.f32.mxu0 0.0
  %577 = vmatmul.mubr.f32.gmra.mxu0 %v503
  %v578 = vpop.f32.mrf.mxu0
  %v579 = vadd.f32 %v496, %v578
  %v580 = vpop.f32.mrf.mxu0
  %581 = vdwg.mxu0
  %s582 = scalar_lea.vmem %s2, 32
  %v583 = vld [vmem:[%s582] sm:$0xff]
  %v584 = vld [vmem:[%s582 + $0x8] sm:$0x3]
  %586 = vset.pattern.permute.xlu0 0
  %587 = vperm.xlu0 %586, %v583
  %v588 = vpop.permute.xlu0 %587
  %591 = vset.pattern.permute.xlu0 0
  %592 = vperm.xlu0 %591, %v584
  %v593 = vpop.permute.xlu0 %592
  %v595 = vadd.f32 %v574, %v588
  %v596 = vadd.f32 %v579, %v593
  %s597 = scalar_lea.vmem %s1, 80
  %v598 = vld [vmem:[%s597] sm:$0xff]
  %v599 = vld [vmem:[%s597 + $0x8] sm:$0x3]
  %s600 = scalar_lea.vmem %s1, 112
  %v601 = vld [vmem:[%s600] sm:$0xff]
  %v602 = vld [vmem:[%s600 + $0x8] sm:$0x3]
  %v604 = vsel %vm415, %v601, 0
  %v607 = vsel %vm415, %v602, 0
  %609 = vmatprep.subr.mxu0 0.0
  %610 = vmatpush1.msra.mxu0 0.0
  %611 = vmatprep.subr.mxu0 0.0
  %612 = vmatpush1.msra.mxu0 0.0
  %613 = vmatprep.subr.mxu0 0.0
  %614 = vmatpush1.msra.mxu0 0.0
  %615 = vmatprep.subr.mxu0 0.0
  %616 = vmatpush1.msra.mxu0 0.0
  %617 = vmatprep.subr.mxu0 0.0
  %618 = vmatpush1.msra.mxu0 0.0
  %619 = vmatprep.subr.mxu0 0.0
  %620 = vmatpush1.msra.mxu0 0.0
  %621 = vmatprep.subr.mxu0 0.0
  %622 = vmatpush1.msra.mxu0 0.0
  %623 = vmatprep.subr.mxu0 0.0
  %624 = vmatpush1.msra.mxu0 0.0
  %625 = vmatprep.subr.mxu0 0.0
  %626 = vmatpush1.msra.mxu0 0.0
  %627 = vmatprep.subr.mxu0 0.0
  %628 = vmatpush1.msra.mxu0 0.0
  %629 = vmatprep.subr.mxu0 0.0
  %630 = vmatpush1.msra.mxu0 0.0
  %631 = vmatprep.subr.mxu0 0.0
  %632 = vmatpush1.msra.mxu0 0.0
  %633 = vmatprep.subr.mxu0 0.0
  %634 = vmatpush1.msra.mxu0 0.0
  %635 = vmatprep.subr.mxu0 0.0
  %636 = vmatpush1.msra.mxu0 0.0
  %637 = vmatprep.subr.mxu0 0.0
  %638 = vmatpush1.msra.mxu0 %v422
  %639 = vmatprep.subr.mxu0 0.0
  %640 = vmatpush1.msra.mxu0 %v411
  %641 = vmatprep.subr.mxu0 0.0
  %642 = vmatpush2.msra.mxu0 0.0
  %643 = vmatprep.subr.mxu0 0.0
  %644 = vmatpush2.msra.mxu0 0.0
  %645 = vmatprep.subr.mxu0 0.0
  %646 = vmatpush2.msra.mxu0 0.0
  %647 = vmatprep.subr.mxu0 0.0
  %648 = vmatpush2.msra.mxu0 0.0
  %649 = vmatprep.subr.mxu0 0.0
  %650 = vmatpush2.msra.mxu0 0.0
  %651 = vmatprep.subr.mxu0 0.0
  %652 = vmatpush2.msra.mxu0 0.0
  %653 = vmatprep.subr.mxu0 0.0
  %654 = vmatpush2.msra.mxu0 0.0
  %655 = vmatprep.subr.mxu0 0.0
  %656 = vmatpush2.msra.mxu0 0.0
  %657 = vmatprep.subr.mxu0 0.0
  %658 = vmatpush2.msra.mxu0 0.0
  %659 = vmatprep.subr.mxu0 0.0
  %660 = vmatpush2.msra.mxu0 0.0
  %661 = vmatprep.subr.mxu0 0.0
  %662 = vmatpush2.msra.mxu0 0.0
  %663 = vmatprep.subr.mxu0 0.0
  %664 = vmatpush2.msra.mxu0 0.0
  %665 = vmatprep.subr.mxu0 0.0
  %666 = vmatpush2.msra.mxu0 0.0
  %667 = vmatprep.subr.mxu0 0.0
  %668 = vmatpush2.msra.mxu0 0.0
  %669 = vmatprep.subr.mxu0 0.0
  %670 = vmatpush2.msra.mxu0 0.0
  %671 = vmatprep.subr.mxu0 0.0
  %672 = vmatpush2.msra.mxu0 0.0
  %673 = vmatprep.mubr.f32.mxu0 0.0
  %674 = vmatmul.mubr.f32.gmra.mxu0 %v604
  %v675 = vpop.f32.mrf.mxu0
  %v676 = vadd.f32 0.0, %v675
  %v677 = vpop.f32.mrf.mxu0
  %678 = vmatprep.mubr.f32.mxu0 0.0
  %679 = vmatmul.mubr.f32.gmra.mxu0 %v607
  %v680 = vpop.f32.mrf.mxu0
  %v681 = vadd.f32 0.0, %v680
  %v682 = vpop.f32.mrf.mxu0
  %683 = vdwg.mxu0
  %v685 = vsel %vm415, %v598, 0
  %v688 = vsel %vm415, %v599, 0
  %690 = vmatprep.subr.mxu0 0.0
  %691 = vmatpush1.msra.mxu0 0.0
  %692 = vmatprep.subr.mxu0 0.0
  %693 = vmatpush1.msra.mxu0 0.0
  %694 = vmatprep.subr.mxu0 0.0
  %695 = vmatpush1.msra.mxu0 0.0
  %696 = vmatprep.subr.mxu0 0.0
  %697 = vmatpush1.msra.mxu0 0.0
  %698 = vmatprep.subr.mxu0 0.0
  %699 = vmatpush1.msra.mxu0 0.0
  %700 = vmatprep.subr.mxu0 0.0
  %701 = vmatpush1.msra.mxu0 0.0
  %702 = vmatprep.subr.mxu0 0.0
  %703 = vmatpush1.msra.mxu0 0.0
  %704 = vmatprep.subr.mxu0 0.0
  %705 = vmatpush1.msra.mxu0 0.0
  %706 = vmatprep.subr.mxu0 0.0
  %707 = vmatpush1.msra.mxu0 0.0
  %708 = vmatprep.subr.mxu0 0.0
  %709 = vmatpush1.msra.mxu0 0.0
  %710 = vmatprep.subr.mxu0 0.0
  %711 = vmatpush1.msra.mxu0 0.0
  %712 = vmatprep.subr.mxu0 0.0
  %713 = vmatpush1.msra.mxu0 0.0
  %714 = vmatprep.subr.mxu0 0.0
  %715 = vmatpush1.msra.mxu0 0.0
  %716 = vmatprep.subr.mxu0 0.0
  %717 = vmatpush1.msra.mxu0 0.0
  %718 = vmatprep.subr.mxu0 0.0
  %719 = vmatpush1.msra.mxu0 %v505
  %720 = vmatprep.subr.mxu0 0.0
  %721 = vmatpush1.msra.mxu0 %v400
  %722 = vmatprep.subr.mxu0 0.0
  %723 = vmatpush2.msra.mxu0 0.0
  %724 = vmatprep.subr.mxu0 0.0
  %725 = vmatpush2.msra.mxu0 0.0
  %726 = vmatprep.subr.mxu0 0.0
  %727 = vmatpush2.msra.mxu0 0.0
  %728 = vmatprep.subr.mxu0 0.0
  %729 = vmatpush2.msra.mxu0 0.0
  %730 = vmatprep.subr.mxu0 0.0
  %731 = vmatpush2.msra.mxu0 0.0
  %732 = vmatprep.subr.mxu0 0.0
  %733 = vmatpush2.msra.mxu0 0.0
  %734 = vmatprep.subr.mxu0 0.0
  %735 = vmatpush2.msra.mxu0 0.0
  %736 = vmatprep.subr.mxu0 0.0
  %737 = vmatpush2.msra.mxu0 0.0
  %738 = vmatprep.subr.mxu0 0.0
  %739 = vmatpush2.msra.mxu0 0.0
  %740 = vmatprep.subr.mxu0 0.0
  %741 = vmatpush2.msra.mxu0 0.0
  %742 = vmatprep.subr.mxu0 0.0
  %743 = vmatpush2.msra.mxu0 0.0
  %744 = vmatprep.subr.mxu0 0.0
  %745 = vmatpush2.msra.mxu0 0.0
  %746 = vmatprep.subr.mxu0 0.0
  %747 = vmatpush2.msra.mxu0 0.0
  %748 = vmatprep.subr.mxu0 0.0
  %749 = vmatpush2.msra.mxu0 0.0
  %750 = vmatprep.subr.mxu0 0.0
  %751 = vmatpush2.msra.mxu0 0.0
  %752 = vmatprep.subr.mxu0 0.0
  %753 = vmatpush2.msra.mxu0 0.0
  %754 = vmatprep.mubr.f32.mxu0 0.0
  %755 = vmatmul.mubr.f32.gmra.mxu0 %v685
  %v756 = vpop.f32.mrf.mxu0
  %v757 = vadd.f32 %v676, %v756
  %v758 = vpop.f32.mrf.mxu0
  %759 = vmatprep.mubr.f32.mxu0 0.0
  %760 = vmatmul.mubr.f32.gmra.mxu0 %v688
  %v761 = vpop.f32.mrf.mxu0
  %v762 = vadd.f32 %v681, %v761
  %v763 = vpop.f32.mrf.mxu0
  %764 = vdwg.mxu0
  %s765 = scalar_lea.vmem %s2, 48
  %v766 = vld [vmem:[%s765] sm:$0xff]
  %v767 = vld [vmem:[%s765 + $0x8] sm:$0x3]
  %769 = vset.pattern.permute.xlu0 0
  %770 = vperm.xlu0 %769, %v766
  %v771 = vpop.permute.xlu0 %770
  %774 = vset.pattern.permute.xlu0 0
  %775 = vperm.xlu0 %774, %v767
  %v776 = vpop.permute.xlu0 %775
  %v778 = vadd.f32 %v757, %v771
  %v779 = vadd.f32 %v762, %v776
  %v780 = vmax.f32 %v595, %v778
  %v781 = vmax.f32 %v596, %v779
  %784 = vrot.lane.b32.xlu0 %v780, 126
  %v785 = vpop.permute.xlu0 %784
  %786 = vrot.lane.b32.xlu0 %v781, 126
  %v787 = vpop.permute.xlu0 %786
  %v790 = vmax.f32 %v780, %v785
  %v791 = vmax.f32 %v781, %v787
  %v792 = vmax.f32 %v790, 0.0
  %v793 = vmax.f32 %v791, 0.0
  %s794 = scalar_lea.vmem %s1, 128
  %v795 = vld [vmem:[%s794] sm:$0xff]
  %v796 = vld [vmem:[%s794 + $0x8] sm:$0x3]
  %s797 = scalar_lea.vmem %s1, 160
  %v798 = vld [vmem:[%s797] sm:$0xff]
  %v799 = vld [vmem:[%s797 + $0x8] sm:$0x3]
  %802 = vrot.lane.b32.xlu0 %v792, 124
  %v803 = vpop.permute.xlu0 %802
  %804 = vrot.lane.b32.xlu0 %v793, 124
  %v805 = vpop.permute.xlu0 %804
  %v808 = vsel %vm415, %v798, 0
  %v811 = vsel %vm415, %v799, 0
  %v813 = vsel %vm30, %v805, 0
  %815 = vmatprep.subr.mxu0 0.0
  %816 = vmatpush1.msra.mxu0 0.0
  %817 = vmatprep.subr.mxu0 0.0
  %818 = vmatpush1.msra.mxu0 0.0
  %819 = vmatprep.subr.mxu0 0.0
  %820 = vmatpush1.msra.mxu0 0.0
  %821 = vmatprep.subr.mxu0 0.0
  %822 = vmatpush1.msra.mxu0 0.0
  %823 = vmatprep.subr.mxu0 0.0
  %824 = vmatpush1.msra.mxu0 0.0
  %825 = vmatprep.subr.mxu0 0.0
  %826 = vmatpush1.msra.mxu0 0.0
  %827 = vmatprep.subr.mxu0 0.0
  %828 = vmatpush1.msra.mxu0 0.0
  %829 = vmatprep.subr.mxu0 0.0
  %830 = vmatpush1.msra.mxu0 0.0
  %831 = vmatprep.subr.mxu0 0.0
  %832 = vmatpush1.msra.mxu0 0.0
  %833 = vmatprep.subr.mxu0 0.0
  %834 = vmatpush1.msra.mxu0 0.0
  %835 = vmatprep.subr.mxu0 0.0
  %836 = vmatpush1.msra.mxu0 0.0
  %837 = vmatprep.subr.mxu0 0.0
  %838 = vmatpush1.msra.mxu0 0.0
  %839 = vmatprep.subr.mxu0 0.0
  %840 = vmatpush1.msra.mxu0 0.0
  %841 = vmatprep.subr.mxu0 0.0
  %842 = vmatpush1.msra.mxu0 0.0
  %843 = vmatprep.subr.mxu0 0.0
  %844 = vmatpush1.msra.mxu0 %v813
  %845 = vmatprep.subr.mxu0 0.0
  %846 = vmatpush1.msra.mxu0 %v803
  %847 = vmatprep.subr.mxu0 0.0
  %848 = vmatpush2.msra.mxu0 0.0
  %849 = vmatprep.subr.mxu0 0.0
  %850 = vmatpush2.msra.mxu0 0.0
  %851 = vmatprep.subr.mxu0 0.0
  %852 = vmatpush2.msra.mxu0 0.0
  %853 = vmatprep.subr.mxu0 0.0
  %854 = vmatpush2.msra.mxu0 0.0
  %855 = vmatprep.subr.mxu0 0.0
  %856 = vmatpush2.msra.mxu0 0.0
  %857 = vmatprep.subr.mxu0 0.0
  %858 = vmatpush2.msra.mxu0 0.0
  %859 = vmatprep.subr.mxu0 0.0
  %860 = vmatpush2.msra.mxu0 0.0
  %861 = vmatprep.subr.mxu0 0.0
  %862 = vmatpush2.msra.mxu0 0.0
  %863 = vmatprep.subr.mxu0 0.0
  %864 = vmatpush2.msra.mxu0 0.0
  %865 = vmatprep.subr.mxu0 0.0
  %866 = vmatpush2.msra.mxu0 0.0
  %867 = vmatprep.subr.mxu0 0.0
  %868 = vmatpush2.msra.mxu0 0.0
  %869 = vmatprep.subr.mxu0 0.0
  %870 = vmatpush2.msra.mxu0 0.0
  %871 = vmatprep.subr.mxu0 0.0
  %872 = vmatpush2.msra.mxu0 0.0
  %873 = vmatprep.subr.mxu0 0.0
  %874 = vmatpush2.msra.mxu0 0.0
  %875 = vmatprep.subr.mxu0 0.0
  %876 = vmatpush2.msra.mxu0 0.0
  %877 = vmatprep.subr.mxu0 0.0
  %878 = vmatpush2.msra.mxu0 0.0
  %879 = vmatprep.mubr.f32.mxu0 0.0
  %880 = vmatmul.mubr.f32.gmra.mxu0 %v808
  %v881 = vpop.f32.mrf.mxu0
  %v882 = vadd.f32 0.0, %v881
  %v883 = vpop.f32.mrf.mxu0
  %884 = vmatprep.mubr.f32.mxu0 0.0
  %885 = vmatmul.mubr.f32.gmra.mxu0 %v811
  %v886 = vpop.f32.mrf.mxu0
  %v887 = vadd.f32 0.0, %v886
  %v888 = vpop.f32.mrf.mxu0
  %889 = vdwg.mxu0
  %v891 = vsel %vm415, %v795, 0
  %v894 = vsel %vm415, %v796, 0
  %v896 = vsel %vm30, %v793, 0
  %898 = vmatprep.subr.mxu0 0.0
  %899 = vmatpush1.msra.mxu0 0.0
  %900 = vmatprep.subr.mxu0 0.0
  %901 = vmatpush1.msra.mxu0 0.0
  %902 = vmatprep.subr.mxu0 0.0
  %903 = vmatpush1.msra.mxu0 0.0
  %904 = vmatprep.subr.mxu0 0.0
  %905 = vmatpush1.msra.mxu0 0.0
  %906 = vmatprep.subr.mxu0 0.0
  %907 = vmatpush1.msra.mxu0 0.0
  %908 = vmatprep.subr.mxu0 0.0
  %909 = vmatpush1.msra.mxu0 0.0
  %910 = vmatprep.subr.mxu0 0.0
  %911 = vmatpush1.msra.mxu0 0.0
  %912 = vmatprep.subr.mxu0 0.0
  %913 = vmatpush1.msra.mxu0 0.0
  %914 = vmatprep.subr.mxu0 0.0
  %915 = vmatpush1.msra.mxu0 0.0
  %916 = vmatprep.subr.mxu0 0.0
  %917 = vmatpush1.msra.mxu0 0.0
  %918 = vmatprep.subr.mxu0 0.0
  %919 = vmatpush1.msra.mxu0 0.0
  %920 = vmatprep.subr.mxu0 0.0
  %921 = vmatpush1.msra.mxu0 0.0
  %922 = vmatprep.subr.mxu0 0.0
  %923 = vmatpush1.msra.mxu0 0.0
  %924 = vmatprep.subr.mxu0 0.0
  %925 = vmatpush1.msra.mxu0 0.0
  %926 = vmatprep.subr.mxu0 0.0
  %927 = vmatpush1.msra.mxu0 %v896
  %928 = vmatprep.subr.mxu0 0.0
  %929 = vmatpush1.msra.mxu0 %v792
  %930 = vmatprep.subr.mxu0 0.0
  %931 = vmatpush2.msra.mxu0 0.0
  %932 = vmatprep.subr.mxu0 0.0
  %933 = vmatpush2.msra.mxu0 0.0
  %934 = vmatprep.subr.mxu0 0.0
  %935 = vmatpush2.msra.mxu0 0.0
  %936 = vmatprep.subr.mxu0 0.0
  %937 = vmatpush2.msra.mxu0 0.0
  %938 = vmatprep.subr.mxu0 0.0
  %939 = vmatpush2.msra.mxu0 0.0
  %940 = vmatprep.subr.mxu0 0.0
  %941 = vmatpush2.msra.mxu0 0.0
  %942 = vmatprep.subr.mxu0 0.0
  %943 = vmatpush2.msra.mxu0 0.0
  %944 = vmatprep.subr.mxu0 0.0
  %945 = vmatpush2.msra.mxu0 0.0
  %946 = vmatprep.subr.mxu0 0.0
  %947 = vmatpush2.msra.mxu0 0.0
  %948 = vmatprep.subr.mxu0 0.0
  %949 = vmatpush2.msra.mxu0 0.0
  %950 = vmatprep.subr.mxu0 0.0
  %951 = vmatpush2.msra.mxu0 0.0
  %952 = vmatprep.subr.mxu0 0.0
  %953 = vmatpush2.msra.mxu0 0.0
  %954 = vmatprep.subr.mxu0 0.0
  %955 = vmatpush2.msra.mxu0 0.0
  %956 = vmatprep.subr.mxu0 0.0
  %957 = vmatpush2.msra.mxu0 0.0
  %958 = vmatprep.subr.mxu0 0.0
  %959 = vmatpush2.msra.mxu0 0.0
  %960 = vmatprep.subr.mxu0 0.0
  %961 = vmatpush2.msra.mxu0 0.0
  %962 = vmatprep.mubr.f32.mxu0 0.0
  %963 = vmatmul.mubr.f32.gmra.mxu0 %v891
  %v964 = vpop.f32.mrf.mxu0
  %v965 = vadd.f32 %v882, %v964
  %v966 = vpop.f32.mrf.mxu0
  %967 = vmatprep.mubr.f32.mxu0 0.0
  %968 = vmatmul.mubr.f32.gmra.mxu0 %v894
  %v969 = vpop.f32.mrf.mxu0
  %v970 = vadd.f32 %v887, %v969
  %v971 = vpop.f32.mrf.mxu0
  %972 = vdwg.mxu0
  %s973 = scalar_lea.vmem %s2, 64
  %v974 = vld [vmem:[%s973] sm:$0xff]
  %v975 = vld [vmem:[%s973 + $0x8] sm:$0x3]
  %977 = vset.pattern.permute.xlu0 0
  %978 = vperm.xlu0 %977, %v974
  %v979 = vpop.permute.xlu0 %978
  %982 = vset.pattern.permute.xlu0 0
  %983 = vperm.xlu0 %982, %v975
  %v984 = vpop.permute.xlu0 %983
  %v986 = vadd.f32 %v965, %v979
  %v987 = vadd.f32 %v970, %v984
  %s988 = scalar_lea.vmem %s1, 144
  %v989 = vld [vmem:[%s988] sm:$0xff]
  %v990 = vld [vmem:[%s988 + $0x8] sm:$0x3]
  %s991 = scalar_lea.vmem %s1, 176
  %v992 = vld [vmem:[%s991] sm:$0xff]
  %v993 = vld [vmem:[%s991 + $0x8] sm:$0x3]
  %v995 = vsel %vm415, %v992, 0
  %v998 = vsel %vm415, %v993, 0
  %1000 = vmatprep.subr.mxu0 0.0
  %1001 = vmatpush1.msra.mxu0 0.0
  %1002 = vmatprep.subr.mxu0 0.0
  %1003 = vmatpush1.msra.mxu0 0.0
  %1004 = vmatprep.subr.mxu0 0.0
  %1005 = vmatpush1.msra.mxu0 0.0
  %1006 = vmatprep.subr.mxu0 0.0
  %1007 = vmatpush1.msra.mxu0 0.0
  %1008 = vmatprep.subr.mxu0 0.0
  %1009 = vmatpush1.msra.mxu0 0.0
  %1010 = vmatprep.subr.mxu0 0.0
  %1011 = vmatpush1.msra.mxu0 0.0
  %1012 = vmatprep.subr.mxu0 0.0
  %1013 = vmatpush1.msra.mxu0 0.0
  %1014 = vmatprep.subr.mxu0 0.0
  %1015 = vmatpush1.msra.mxu0 0.0
  %1016 = vmatprep.subr.mxu0 0.0
  %1017 = vmatpush1.msra.mxu0 0.0
  %1018 = vmatprep.subr.mxu0 0.0
  %1019 = vmatpush1.msra.mxu0 0.0
  %1020 = vmatprep.subr.mxu0 0.0
  %1021 = vmatpush1.msra.mxu0 0.0
  %1022 = vmatprep.subr.mxu0 0.0
  %1023 = vmatpush1.msra.mxu0 0.0
  %1024 = vmatprep.subr.mxu0 0.0
  %1025 = vmatpush1.msra.mxu0 0.0
  %1026 = vmatprep.subr.mxu0 0.0
  %1027 = vmatpush1.msra.mxu0 0.0
  %1028 = vmatprep.subr.mxu0 0.0
  %1029 = vmatpush1.msra.mxu0 %v813
  %1030 = vmatprep.subr.mxu0 0.0
  %1031 = vmatpush1.msra.mxu0 %v803
  %1032 = vmatprep.subr.mxu0 0.0
  %1033 = vmatpush2.msra.mxu0 0.0
  %1034 = vmatprep.subr.mxu0 0.0
  %1035 = vmatpush2.msra.mxu0 0.0
  %1036 = vmatprep.subr.mxu0 0.0
  %1037 = vmatpush2.msra.mxu0 0.0
  %1038 = vmatprep.subr.mxu0 0.0
  %1039 = vmatpush2.msra.mxu0 0.0
  %1040 = vmatprep.subr.mxu0 0.0
  %1041 = vmatpush2.msra.mxu0 0.0
  %1042 = vmatprep.subr.mxu0 0.0
  %1043 = vmatpush2.msra.mxu0 0.0
  %1044 = vmatprep.subr.mxu0 0.0
  %1045 = vmatpush2.msra.mxu0 0.0
  %1046 = vmatprep.subr.mxu0 0.0
  %1047 = vmatpush2.msra.mxu0 0.0
  %1048 = vmatprep.subr.mxu0 0.0
  %1049 = vmatpush2.msra.mxu0 0.0
  %1050 = vmatprep.subr.mxu0 0.0
  %1051 = vmatpush2.msra.mxu0 0.0
  %1052 = vmatprep.subr.mxu0 0.0
  %1053 = vmatpush2.msra.mxu0 0.0
  %1054 = vmatprep.subr.mxu0 0.0
  %1055 = vmatpush2.msra.mxu0 0.0
  %1056 = vmatprep.subr.mxu0 0.0
  %1057 = vmatpush2.msra.mxu0 0.0
  %1058 = vmatprep.subr.mxu0 0.0
  %1059 = vmatpush2.msra.mxu0 0.0
  %1060 = vmatprep.subr.mxu0 0.0
  %1061 = vmatpush2.msra.mxu0 0.0
  %1062 = vmatprep.subr.mxu0 0.0
  %1063 = vmatpush2.msra.mxu0 0.0
  %1064 = vmatprep.mubr.f32.mxu0 0.0
  %1065 = vmatmul.mubr.f32.gmra.mxu0 %v995
  %v1066 = vpop.f32.mrf.mxu0
  %v1067 = vadd.f32 0.0, %v1066
  %v1068 = vpop.f32.mrf.mxu0
  %1069 = vmatprep.mubr.f32.mxu0 0.0
  %1070 = vmatmul.mubr.f32.gmra.mxu0 %v998
  %v1071 = vpop.f32.mrf.mxu0
  %v1072 = vadd.f32 0.0, %v1071
  %v1073 = vpop.f32.mrf.mxu0
  %1074 = vdwg.mxu0
  %v1076 = vsel %vm415, %v989, 0
  %v1079 = vsel %vm415, %v990, 0
  %1081 = vmatprep.subr.mxu0 0.0
  %1082 = vmatpush1.msra.mxu0 0.0
  %1083 = vmatprep.subr.mxu0 0.0
  %1084 = vmatpush1.msra.mxu0 0.0
  %1085 = vmatprep.subr.mxu0 0.0
  %1086 = vmatpush1.msra.mxu0 0.0
  %1087 = vmatprep.subr.mxu0 0.0
  %1088 = vmatpush1.msra.mxu0 0.0
  %1089 = vmatprep.subr.mxu0 0.0
  %1090 = vmatpush1.msra.mxu0 0.0
  %1091 = vmatprep.subr.mxu0 0.0
  %1092 = vmatpush1.msra.mxu0 0.0
  %1093 = vmatprep.subr.mxu0 0.0
  %1094 = vmatpush1.msra.mxu0 0.0
  %1095 = vmatprep.subr.mxu0 0.0
  %1096 = vmatpush1.msra.mxu0 0.0
  %1097 = vmatprep.subr.mxu0 0.0
  %1098 = vmatpush1.msra.mxu0 0.0
  %1099 = vmatprep.subr.mxu0 0.0
  %1100 = vmatpush1.msra.mxu0 0.0
  %1101 = vmatprep.subr.mxu0 0.0
  %1102 = vmatpush1.msra.mxu0 0.0
  %1103 = vmatprep.subr.mxu0 0.0
  %1104 = vmatpush1.msra.mxu0 0.0
  %1105 = vmatprep.subr.mxu0 0.0
  %1106 = vmatpush1.msra.mxu0 0.0
  %1107 = vmatprep.subr.mxu0 0.0
  %1108 = vmatpush1.msra.mxu0 0.0
  %1109 = vmatprep.subr.mxu0 0.0
  %1110 = vmatpush1.msra.mxu0 %v896
  %1111 = vmatprep.subr.mxu0 0.0
  %1112 = vmatpush1.msra.mxu0 %v792
  %1113 = vmatprep.subr.mxu0 0.0
  %1114 = vmatpush2.msra.mxu0 0.0
  %1115 = vmatprep.subr.mxu0 0.0
  %1116 = vmatpush2.msra.mxu0 0.0
  %1117 = vmatprep.subr.mxu0 0.0
  %1118 = vmatpush2.msra.mxu0 0.0
  %1119 = vmatprep.subr.mxu0 0.0
  %1120 = vmatpush2.msra.mxu0 0.0
  %1121 = vmatprep.subr.mxu0 0.0
  %1122 = vmatpush2.msra.mxu0 0.0
  %1123 = vmatprep.subr.mxu0 0.0
  %1124 = vmatpush2.msra.mxu0 0.0
  %1125 = vmatprep.subr.mxu0 0.0
  %1126 = vmatpush2.msra.mxu0 0.0
  %1127 = vmatprep.subr.mxu0 0.0
  %1128 = vmatpush2.msra.mxu0 0.0
  %1129 = vmatprep.subr.mxu0 0.0
  %1130 = vmatpush2.msra.mxu0 0.0
  %1131 = vmatprep.subr.mxu0 0.0
  %1132 = vmatpush2.msra.mxu0 0.0
  %1133 = vmatprep.subr.mxu0 0.0
  %1134 = vmatpush2.msra.mxu0 0.0
  %1135 = vmatprep.subr.mxu0 0.0
  %1136 = vmatpush2.msra.mxu0 0.0
  %1137 = vmatprep.subr.mxu0 0.0
  %1138 = vmatpush2.msra.mxu0 0.0
  %1139 = vmatprep.subr.mxu0 0.0
  %1140 = vmatpush2.msra.mxu0 0.0
  %1141 = vmatprep.subr.mxu0 0.0
  %1142 = vmatpush2.msra.mxu0 0.0
  %1143 = vmatprep.subr.mxu0 0.0
  %1144 = vmatpush2.msra.mxu0 0.0
  %1145 = vmatprep.mubr.f32.mxu0 0.0
  %1146 = vmatmul.mubr.f32.gmra.mxu0 %v1076
  %v1147 = vpop.f32.mrf.mxu0
  %v1148 = vadd.f32 %v1067, %v1147
  %v1149 = vpop.f32.mrf.mxu0
  %1150 = vmatprep.mubr.f32.mxu0 0.0
  %1151 = vmatmul.mubr.f32.gmra.mxu0 %v1079
  %v1152 = vpop.f32.mrf.mxu0
  %v1153 = vadd.f32 %v1072, %v1152
  %v1154 = vpop.f32.mrf.mxu0
  %1155 = vdwg.mxu0
  %s1156 = scalar_lea.vmem %s2, 80
  %v1157 = vld [vmem:[%s1156] sm:$0xff]
  %v1158 = vld [vmem:[%s1156 + $0x8] sm:$0x3]
  %1160 = vset.pattern.permute.xlu0 0
  %1161 = vperm.xlu0 %1160, %v1157
  %v1162 = vpop.permute.xlu0 %1161
  %1165 = vset.pattern.permute.xlu0 0
  %1166 = vperm.xlu0 %1165, %v1158
  %v1167 = vpop.permute.xlu0 %1166
  %v1169 = vadd.f32 %v1148, %v1162
  %v1170 = vadd.f32 %v1153, %v1167
  %v1171 = vmax.f32 %v986, %v1169
  %v1172 = vmax.f32 %v987, %v1170
  %1175 = vrot.lane.b32.xlu0 %v1171, 124
  %v1176 = vpop.permute.xlu0 %1175
  %1177 = vrot.lane.b32.xlu0 %v1172, 124
  %v1178 = vpop.permute.xlu0 %1177
  %v1181 = vmax.f32 %v1171, %v1176
  %v1182 = vmax.f32 %v1172, %v1178
  %v1183 = vmax.f32 %v1181, 0.0
  %v1184 = vmax.f32 %v1182, 0.0
  %vm1185 = vcmask 932864
  %1186 = vst.msk [vmem:[%s3] sm:$0xff] %vm1185, %v1183
  %vm1187 = vcmask 926720
  %1188 = vst.msk [vmem:[%s3 + $0x8] sm:$0x3] %vm1187, %v1184
  // Predicated region
  $region14: #{cnn_forward.1} parent=0 // pred_check
    _
  $region15: #{cnn_forward.1} parent=0 // pred_check_branch
    %1190 = sbr.rel (0) target = $region17
  $region16: #{cnn_forward.1} parent=0 // pred_region
    _
  $region17: #{cnn_forward.1} parent=0 // pred_fallthru
    _
  // Predicated region
  $region18: #{cnn_forward.1} parent=0 // pred_check
    _
  $region19: #{cnn_forward.1} parent=0 // pred_check_branch
    %1192 = sbr.rel (0) target = $region21
  $region20: #{cnn_forward.1} parent=0 // pred_region
    _
  $region21: #{cnn_forward.1} parent=0 // pred_fallthru
    _

</llo_original>
